<compile_context>
chip_gen: v7x
topology: tpu7x:2x2x1
jax: 0.10.0
libtpu: 0.0.40
codegen_flags: <defaults>
</compile_context>

<pallas_src>
import jax
import jax.numpy as jnp
from jax.experimental import pallas as pl
from jax.experimental.pallas import tpu as pltpu

DIM_INTERMEDIATE = 112
NUM_CLASSES = 2
NUM_NODE_FEATURES = 384
NUM_LAYERS = 6
LANE = 128     # TPU lane width; all feature dims padded to this inside the kernel
SUBLANE = 8    # f32 sublane granularity for the node dimension


# ---------------------------------------------------------------------------
# Fused Pallas kernel: all 6 GCNConv layers in one invocation (no grid).
#   a_ref : (N, N)        f32  normalized adjacency
#   x_ref : (N, 384)      f32  input node features
#   w1_ref: (384, 128)    f32  layer-1 weight (cols zero-padded 112 -> 128)
#   wr_ref: (5, 128, 128) f32  layers 2..6 weights (rows/cols zero-padded)
#   b_ref : (6, 128)      f32  biases (zero-padded)
#   o_ref : (N, 128)      f32  padded logits (real classes in cols 0..1)
# ---------------------------------------------------------------------------
def _gcn_fused_kernel(a_ref, x_ref, w1_ref, wr_ref, b_ref, o_ref):
    a = a_ref[...]

    # Layer 1: X @ W1 on the MXU, then A_hat @ (XW) + b, relu.
    xw = jnp.dot(x_ref[...], w1_ref[...], preferred_element_type=jnp.float32)
    h = jnp.dot(a, xw, preferred_element_type=jnp.float32) + b_ref[0:1, :]
    h = jnp.maximum(h, 0.0)

    # Layers 2..6: activations stay resident in VMEM/vregs; static unrolled loop.
    for li in range(NUM_LAYERS - 1):
        xw = jnp.dot(h, wr_ref[li], preferred_element_type=jnp.float32)
        h = jnp.dot(a, xw, preferred_element_type=jnp.float32) + b_ref[li + 1:li + 2, :]
        if li < NUM_LAYERS - 2:  # no relu after the final layer
            h = jnp.maximum(h, 0.0)

    # Lane-dense (N, 128) store; padded columns are exactly zero.
    o_ref[...] = h.astype(o_ref.dtype)


def gcn_fused(a_hat, x, w1p, wrp, bp):
    """Single-block, gridless fused forward (everything lives in VMEM)."""
    n = x.shape[0]
    return pl.pallas_call(
        _gcn_fused_kernel,
        out_shape=jax.ShapeDtypeStruct((n, LANE), jnp.float32),
    )(a_hat, x, w1p, wrp, bp)


@jax.jit
def gcn_forward(x, a_hat, w1p, wrp, bp):
    n = x.shape[0]
    # Pad the node axis to a sublane multiple (static shapes -> resolved at trace).
    n_pad = (-n) % SUBLANE
    if n_pad:
        x = jnp.pad(x, ((0, n_pad), (0, 0)))
        a_hat = jnp.pad(a_hat, ((0, n_pad), (0, n_pad)))
    out_padded = gcn_fused(a_hat, x, w1p, wrp, bp)
    return out_padded[:n, :NUM_CLASSES]


# ---------------------------------------------------------------------------
# Glue: dense symmetric-normalized adjacency from edge_index (plain JAX,
# computed once per graph — hoisted out of the per-forward hot path).
# ---------------------------------------------------------------------------
def normalized_adjacency(edge_index, num_nodes):
    """A_hat = D^{-1/2} (A + remaining self-loops) D^{-1/2}.

    Matches PyG gcn_norm: duplicate edges scatter-ADD, self-loops of weight 1
    are added only to nodes that lack one. edge_index is (2, E) [src; dst],
    message flow source_to_target.
    """
    src, dst = edge_index[0], edge_index[1]
    adj = jnp.zeros((num_nodes, num_nodes), jnp.float32)
    adj = adj.at[dst, src].add(1.0)
    idx = jnp.arange(num_nodes)
    diag = jnp.diagonal(adj)
    adj = adj.at[idx, idx].set(jnp.where(diag > 0.0, diag, 1.0))
    deg = adj.sum(axis=1)
    d_inv_sqrt = jnp.where(deg > 0.0, deg ** -0.5, 0.0)
    return d_inv_sqrt[:, None] * adj * d_inv_sqrt[None, :]


# ---------------------------------------------------------------------------
# Deterministic parameter init (glorot-style weights, zero bias) + padding.
# ---------------------------------------------------------------------------
def init_params(key):
    dims = [NUM_NODE_FEATURES] + [DIM_INTERMEDIATE] * 5 + [NUM_CLASSES]
    params = []
    for i in range(NUM_LAYERS):
        key, wk = jax.random.split(key)
        f_in, f_out = dims[i], dims[i + 1]
        scale = jnp.sqrt(6.0 / (f_in + f_out))
        w = jax.random.uniform(wk, (f_in, f_out), jnp.float32, -scale, scale)
        b = jnp.zeros((f_out,), jnp.float32)
        params.append((w, b))
    return params


def prepare_params(params):
    """Zero-pad weights/biases to 128-wide lanes and stack layers 2..6."""
    w1, b1 = params[0]
    w1p = jnp.pad(w1, ((0, 0), (0, LANE - w1.shape[1])))
    biases = [jnp.pad(b1, (0, LANE - b1.shape[0]))]
    w_rest = []
    for w, b in params[1:]:
        w_rest.append(jnp.pad(w, ((0, LANE - w.shape[0]), (0, LANE - w.shape[1]))))
        biases.append(jnp.pad(b, (0, LANE - b.shape[0])))
    return w1p, jnp.stack(w_rest), jnp.stack(biases)


if __name__ == "__main__":
    key = jax.random.PRNGKey(0)

    num_nodes = 16
    num_edges = 32

    # Random graph (no self-loops in the generated edge list).
    key, ek1, ek2, xk, pk = jax.random.split(key, 5)
    src = jax.random.randint(ek1, (num_edges,), 0, num_nodes, dtype=jnp.int32)
    offs = jax.random.randint(ek2, (num_edges,), 1, num_nodes, dtype=jnp.int32)
    dst = (src + offs) % num_nodes
    edge_index = jnp.stack([src, dst], axis=0)  # (2, E)

    x = jax.random.normal(xk, (num_nodes, NUM_NODE_FEATURES), jnp.float32)
    params = init_params(pk)

    # Hoisted per-graph precompute (done once, outside the jitted hot path).
    a_hat = normalized_adjacency(edge_index, num_nodes)
    w1p, wrp, bp = prepare_params(params)

    out = gcn_forward(x, a_hat, w1p, wrp, bp)
    out = jax.block_until_ready(out)

    assert out.shape == (num_nodes, NUM_CLASSES), out.shape
    assert out.dtype == jnp.float32

    # Pure-JAX reference check (f32, unpadded params).
    h_ref = x
    for li, (w, b) in enumerate(params):
        h_ref = a_hat @ (h_ref @ w) + b
        if li != NUM_LAYERS - 1:
            h_ref = jnp.maximum(h_ref, 0.0)
    assert jnp.allclose(out, h_ref, atol=1e-4, rtol=1e-4)

    print("KERNEL_OK")
</pallas_src>

<mosaic_0001>
module attributes {stable_mosaic.version = 11 : i64} {
  func.func @_gcn_fused_kernel(%arg0: memref<16x16xf32, #tpu.memory_space<vmem>>, %arg1: memref<16x384xf32, #tpu.memory_space<vmem>>, %arg2: memref<384x128xf32, #tpu.memory_space<vmem>>, %arg3: memref<5x128x128xf32, #tpu.memory_space<vmem>>, %arg4: memref<6x128xf32, #tpu.memory_space<vmem>>, %arg5: memref<16x128xf32, #tpu.memory_space<vmem>>) attributes {dimension_semantics = [], scalar_prefetch = 0 : i64, scratch_operands = 0 : i64, tpu.core_type = #tpu.core_type<tc>} {
    %c0 = arith.constant 0 : index
    %c0_0 = arith.constant 0 : index
    %0 = vector.load %arg0[%c0, %c0_0] : memref<16x16xf32, #tpu.memory_space<vmem>>, vector<16x16xf32>
    %c0_1 = arith.constant 0 : index
    %c0_2 = arith.constant 0 : index
    %1 = vector.load %arg1[%c0_1, %c0_2] : memref<16x384xf32, #tpu.memory_space<vmem>>, vector<16x384xf32>
    %c0_3 = arith.constant 0 : index
    %c0_4 = arith.constant 0 : index
    %2 = vector.load %arg2[%c0_3, %c0_4] : memref<384x128xf32, #tpu.memory_space<vmem>>, vector<384x128xf32>
    %cst = arith.constant dense<0.000000e+00> : vector<16x128xf32>
    %3 = tpu.matmul %1, %2, %cst {dimension_numbers = #tpu.dot_dimension_numbers<[1], [0], [0], [1], [0, 0, 1, 1], [], []>} : vector<16x384xf32>, vector<384x128xf32>, vector<16x128xf32> -> vector<16x128xf32>
    %cst_5 = arith.constant dense<0.000000e+00> : vector<16x128xf32>
    %4 = tpu.matmul %0, %3, %cst_5 {dimension_numbers = #tpu.dot_dimension_numbers<[1], [0], [0], [1], [0, 0, 1, 1], [], []>} : vector<16x16xf32>, vector<16x128xf32>, vector<16x128xf32> -> vector<16x128xf32>
    %c0_6 = arith.constant 0 : index
    %c0_7 = arith.constant 0 : index
    %5 = vector.load %arg4[%c0_6, %c0_7] : memref<6x128xf32, #tpu.memory_space<vmem>>, vector<1x128xf32>
    %6 = vector.broadcast %5 : vector<1x128xf32> to vector<16x128xf32>
    %7 = arith.addf %4, %6 : vector<16x128xf32>
    %cst_8 = arith.constant 0.000000e+00 : f32
    %8 = vector.broadcast %cst_8 : f32 to vector<16x128xf32>
    %9 = arith.maximumf %7, %8 : vector<16x128xf32>
    %c0_9 = arith.constant 0 : index
    %c0_10 = arith.constant 0 : index
    %c0_11 = arith.constant 0 : index
    %10 = vector.load %arg3[%c0_9, %c0_10, %c0_11] : memref<5x128x128xf32, #tpu.memory_space<vmem>>, vector<1x128x128xf32>
    %11 = vector.shape_cast %10 : vector<1x128x128xf32> to vector<128x128xf32>
    %cst_12 = arith.constant dense<0.000000e+00> : vector<16x128xf32>
    %12 = tpu.matmul %9, %11, %cst_12 {dimension_numbers = #tpu.dot_dimension_numbers<[1], [0], [0], [1], [0, 0, 1, 1], [], []>} : vector<16x128xf32>, vector<128x128xf32>, vector<16x128xf32> -> vector<16x128xf32>
    %cst_13 = arith.constant dense<0.000000e+00> : vector<16x128xf32>
    %13 = tpu.matmul %0, %12, %cst_13 {dimension_numbers = #tpu.dot_dimension_numbers<[1], [0], [0], [1], [0, 0, 1, 1], [], []>} : vector<16x16xf32>, vector<16x128xf32>, vector<16x128xf32> -> vector<16x128xf32>
    %c1 = arith.constant 1 : index
    %c0_14 = arith.constant 0 : index
    %14 = vector.load %arg4[%c1, %c0_14] : memref<6x128xf32, #tpu.memory_space<vmem>>, vector<1x128xf32>
    %15 = vector.broadcast %14 : vector<1x128xf32> to vector<16x128xf32>
    %16 = arith.addf %13, %15 : vector<16x128xf32>
    %cst_15 = arith.constant 0.000000e+00 : f32
    %17 = vector.broadcast %cst_15 : f32 to vector<16x128xf32>
    %18 = arith.maximumf %16, %17 : vector<16x128xf32>
    %c1_16 = arith.constant 1 : index
    %c0_17 = arith.constant 0 : index
    %c0_18 = arith.constant 0 : index
    %19 = vector.load %arg3[%c1_16, %c0_17, %c0_18] : memref<5x128x128xf32, #tpu.memory_space<vmem>>, vector<1x128x128xf32>
    %20 = vector.shape_cast %19 : vector<1x128x128xf32> to vector<128x128xf32>
    %cst_19 = arith.constant dense<0.000000e+00> : vector<16x128xf32>
    %21 = tpu.matmul %18, %20, %cst_19 {dimension_numbers = #tpu.dot_dimension_numbers<[1], [0], [0], [1], [0, 0, 1, 1], [], []>} : vector<16x128xf32>, vector<128x128xf32>, vector<16x128xf32> -> vector<16x128xf32>
    %cst_20 = arith.constant dense<0.000000e+00> : vector<16x128xf32>
    %22 = tpu.matmul %0, %21, %cst_20 {dimension_numbers = #tpu.dot_dimension_numbers<[1], [0], [0], [1], [0, 0, 1, 1], [], []>} : vector<16x16xf32>, vector<16x128xf32>, vector<16x128xf32> -> vector<16x128xf32>
    %c2 = arith.constant 2 : index
    %c0_21 = arith.constant 0 : index
    %23 = vector.load %arg4[%c2, %c0_21] : memref<6x128xf32, #tpu.memory_space<vmem>>, vector<1x128xf32>
    %24 = vector.broadcast %23 : vector<1x128xf32> to vector<16x128xf32>
    %25 = arith.addf %22, %24 : vector<16x128xf32>
    %cst_22 = arith.constant 0.000000e+00 : f32
    %26 = vector.broadcast %cst_22 : f32 to vector<16x128xf32>
    %27 = arith.maximumf %25, %26 : vector<16x128xf32>
    %c2_23 = arith.constant 2 : index
    %c0_24 = arith.constant 0 : index
    %c0_25 = arith.constant 0 : index
    %28 = vector.load %arg3[%c2_23, %c0_24, %c0_25] : memref<5x128x128xf32, #tpu.memory_space<vmem>>, vector<1x128x128xf32>
    %29 = vector.shape_cast %28 : vector<1x128x128xf32> to vector<128x128xf32>
    %cst_26 = arith.constant dense<0.000000e+00> : vector<16x128xf32>
    %30 = tpu.matmul %27, %29, %cst_26 {dimension_numbers = #tpu.dot_dimension_numbers<[1], [0], [0], [1], [0, 0, 1, 1], [], []>} : vector<16x128xf32>, vector<128x128xf32>, vector<16x128xf32> -> vector<16x128xf32>
    %cst_27 = arith.constant dense<0.000000e+00> : vector<16x128xf32>
    %31 = tpu.matmul %0, %30, %cst_27 {dimension_numbers = #tpu.dot_dimension_numbers<[1], [0], [0], [1], [0, 0, 1, 1], [], []>} : vector<16x16xf32>, vector<16x128xf32>, vector<16x128xf32> -> vector<16x128xf32>
    %c3 = arith.constant 3 : index
    %c0_28 = arith.constant 0 : index
    %32 = vector.load %arg4[%c3, %c0_28] : memref<6x128xf32, #tpu.memory_space<vmem>>, vector<1x128xf32>
    %33 = vector.broadcast %32 : vector<1x128xf32> to vector<16x128xf32>
    %34 = arith.addf %31, %33 : vector<16x128xf32>
    %cst_29 = arith.constant 0.000000e+00 : f32
    %35 = vector.broadcast %cst_29 : f32 to vector<16x128xf32>
    %36 = arith.maximumf %34, %35 : vector<16x128xf32>
    %c3_30 = arith.constant 3 : index
    %c0_31 = arith.constant 0 : index
    %c0_32 = arith.constant 0 : index
    %37 = vector.load %arg3[%c3_30, %c0_31, %c0_32] : memref<5x128x128xf32, #tpu.memory_space<vmem>>, vector<1x128x128xf32>
    %38 = vector.shape_cast %37 : vector<1x128x128xf32> to vector<128x128xf32>
    %cst_33 = arith.constant dense<0.000000e+00> : vector<16x128xf32>
    %39 = tpu.matmul %36, %38, %cst_33 {dimension_numbers = #tpu.dot_dimension_numbers<[1], [0], [0], [1], [0, 0, 1, 1], [], []>} : vector<16x128xf32>, vector<128x128xf32>, vector<16x128xf32> -> vector<16x128xf32>
    %cst_34 = arith.constant dense<0.000000e+00> : vector<16x128xf32>
    %40 = tpu.matmul %0, %39, %cst_34 {dimension_numbers = #tpu.dot_dimension_numbers<[1], [0], [0], [1], [0, 0, 1, 1], [], []>} : vector<16x16xf32>, vector<16x128xf32>, vector<16x128xf32> -> vector<16x128xf32>
    %c4 = arith.constant 4 : index
    %c0_35 = arith.constant 0 : index
    %41 = vector.load %arg4[%c4, %c0_35] : memref<6x128xf32, #tpu.memory_space<vmem>>, vector<1x128xf32>
    %42 = vector.broadcast %41 : vector<1x128xf32> to vector<16x128xf32>
    %43 = arith.addf %40, %42 : vector<16x128xf32>
    %cst_36 = arith.constant 0.000000e+00 : f32
    %44 = vector.broadcast %cst_36 : f32 to vector<16x128xf32>
    %45 = arith.maximumf %43, %44 : vector<16x128xf32>
    %c4_37 = arith.constant 4 : index
    %c0_38 = arith.constant 0 : index
    %c0_39 = arith.constant 0 : index
    %46 = vector.load %arg3[%c4_37, %c0_38, %c0_39] : memref<5x128x128xf32, #tpu.memory_space<vmem>>, vector<1x128x128xf32>
    %47 = vector.shape_cast %46 : vector<1x128x128xf32> to vector<128x128xf32>
    %cst_40 = arith.constant dense<0.000000e+00> : vector<16x128xf32>
    %48 = tpu.matmul %45, %47, %cst_40 {dimension_numbers = #tpu.dot_dimension_numbers<[1], [0], [0], [1], [0, 0, 1, 1], [], []>} : vector<16x128xf32>, vector<128x128xf32>, vector<16x128xf32> -> vector<16x128xf32>
    %cst_41 = arith.constant dense<0.000000e+00> : vector<16x128xf32>
    %49 = tpu.matmul %0, %48, %cst_41 {dimension_numbers = #tpu.dot_dimension_numbers<[1], [0], [0], [1], [0, 0, 1, 1], [], []>} : vector<16x16xf32>, vector<16x128xf32>, vector<16x128xf32> -> vector<16x128xf32>
    %c5 = arith.constant 5 : index
    %c0_42 = arith.constant 0 : index
    %50 = vector.load %arg4[%c5, %c0_42] : memref<6x128xf32, #tpu.memory_space<vmem>>, vector<1x128xf32>
    %51 = vector.broadcast %50 : vector<1x128xf32> to vector<16x128xf32>
    %52 = arith.addf %49, %51 : vector<16x128xf32>
    %c0_43 = arith.constant 0 : index
    %c0_44 = arith.constant 0 : index
    %53 = vector.load %arg5[%c0_43, %c0_44] : memref<16x128xf32, #tpu.memory_space<vmem>>, vector<16x128xf32>
    tpu.vector_store %arg5[%c0_43, %c0_44], %52 {strides = array<i32>} : memref<16x128xf32, #tpu.memory_space<vmem>>, vector<16x128xf32>,
    return
  }
}

</mosaic_0001>

<llo_original>
// kernel: gcn_forward.1
$region0: #{gcn_forward.1}
  #allocation0 [shape = 'u32[]', space=smem, size = 0x4, offset = 0x4, fixed_abs, tag = 'smem constant byte address 0x4 - core index']
  #allocation1 [shape = 'u32[144,128]{1,0:T(1,128)}', space=vmem, size = 0x12000, scoped, tag = 'internal scratch']
  %s0 = inlined_call_operand.hbm [shape: f32[16,16], index: 0, kind: input, shape index: {}]
  %s1 = inlined_call_operand.hbm [shape: f32[16,384], index: 1, kind: input, shape index: {}]
  %s2 = inlined_call_operand.hbm [shape: f32[384,128], index: 2, kind: input, shape index: {}]
  %s3 = inlined_call_operand.hbm [shape: f32[5,128,128], index: 3, kind: input, shape index: {}]
  %s4 = inlined_call_operand.vmem [shape: f32[6,128], index: 4, kind: input, shape index: {}]
  %s5 = inlined_call_operand.vmem [shape: f32[16,128], index: 5, kind: output, shape index: {}]
  %s6 = sld [smem:[#allocation0]]
  $region46: #{gcn_forward.1} parent=0
    _
  %s8 = ssub.s32 1, %s6
  %s9 = scalar_select 0, %s8, %s6
  $region1: #{gcn_forward.1} parent=0
    #allocation2 [shape = 'u8[8192]{0}', space=vmem, size = 0x2000, scoped, tag = 'input window, operand 0, single buffered']
    #allocation3 [shape = 's32[1]{0}', space=sflag, size = 0x4, scoped, tag = 'scoped memory for gcn_forward.1']
    #allocation4 [shape = 'u8[24576]{0}', space=vmem, size = 0x6000, scoped, tag = 'input window, operand 1, single buffered']
    #allocation5 [shape = 's32[1]{0}', space=sflag, size = 0x4, scoped, tag = 'scoped memory for gcn_forward.1']
    #allocation6 [shape = 'u8[196608]{0}', space=vmem, size = 0x30000, scoped, tag = 'input window, operand 2, single buffered']
    #allocation7 [shape = 'u8[327680]{0}', space=vmem, size = 0x50000, scoped, tag = 'input window, operand 3, single buffered']
    #allocation8 [shape = 's32[1]{0}', space=sflag, size = 0x4, scoped, tag = 'scoped memory for gcn_forward.1']
    %10 = vsyncpa [#allocation3], 0
    %11 = vsyncpa [#allocation5], 0
    %12 = vsyncpa [#allocation8], 0
    // Predicated region
    $region2: #{gcn_forward.1} parent=1 // pred_check
      _
    $region3: #{gcn_forward.1} parent=1 // pred_check_branch
      %14 = sbr.rel (0) target = $region5
    $region4: #{gcn_forward.1} parent=1 // pred_region
      %s16 = ssub.s32 256, 256
      %17 = vsyncadd [#allocation3], %s16
      %s18 = sshll.u32 [#allocation2], 4
      %s19 = int_to_ptr.vmem [resolvable:$true] %s18
      %24 = dma.hbm_to_vmem [thread:$0]  %s0, 256, %s19, [#allocation3], 128, 128, 8
    $region5: #{gcn_forward.1} parent=1 // pred_fallthru
      _
    // Predicated region
    $region6: #{gcn_forward.1} parent=1 // pred_check
      _
    $region7: #{gcn_forward.1} parent=1 // pred_check_branch
      %26 = sbr.rel (0) target = $region9
    $region8: #{gcn_forward.1} parent=1 // pred_region
      %s28 = ssub.s32 768, 768
      %29 = vsyncadd [#allocation5], %s28
      %s30 = sshll.u32 [#allocation4], 4
      %s31 = int_to_ptr.vmem [resolvable:$true] %s30
      %36 = dma.hbm_to_vmem [thread:$0]  %s1, 768, %s31, [#allocation5], 384, 384, 24
    $region9: #{gcn_forward.1} parent=1 // pred_fallthru
      _
    // Predicated region
    $region10: #{gcn_forward.1} parent=1 // pred_check
      _
    $region11: #{gcn_forward.1} parent=1 // pred_check_branch
      %38 = sbr.rel (0) target = $region13
    $region12: #{gcn_forward.1} parent=1 // pred_region
      %s40 = ssub.s32 6144, 6144
      %41 = vsyncadd [#allocation5], %s40
      %s42 = sshll.u32 [#allocation6], 4
      %s43 = int_to_ptr.vmem [resolvable:$true] %s42
      %48 = dma.hbm_to_vmem [thread:$0]  %s2, 6144, %s43, [#allocation5], 128, 128, 8
    $region13: #{gcn_forward.1} parent=1 // pred_fallthru
      _
    // Predicated region
    $region14: #{gcn_forward.1} parent=1 // pred_check
      _
    $region15: #{gcn_forward.1} parent=1 // pred_check_branch
      %50 = sbr.rel (0) target = $region17
    $region16: #{gcn_forward.1} parent=1 // pred_region
      %s52 = ssub.s32 10240, 10240
      %53 = vsyncadd [#allocation8], %s52
      %s54 = sshll.u32 [#allocation7], 4
      %s55 = int_to_ptr.vmem [resolvable:$true] %s54
      %60 = dma.hbm_to_vmem [thread:$0]  %s3, 10240, %s55, [#allocation8], 128, 128, 8
    $region17: #{gcn_forward.1} parent=1 // pred_fallthru
      _
    // Predicated region
    $region18: #{gcn_forward.1} parent=1 // pred_check
      _
    $region19: #{gcn_forward.1} parent=1 // pred_check_branch
      %62 = sbr.rel (0) target = $region21
    $region20: #{gcn_forward.1} parent=1 // pred_region
      _
    $region21: #{gcn_forward.1} parent=1 // pred_fallthru
      _
    // Predicated region
    $region22: #{gcn_forward.1} parent=1 // pred_check
      _
    $region23: #{gcn_forward.1} parent=1 // pred_check_branch
      %64 = sbr.rel (0) target = $region25
    $region24: #{gcn_forward.1} parent=1 // pred_region
      %65 = dma.done [#allocation3], 256
    $region25: #{gcn_forward.1} parent=1 // pred_fallthru
      _
    // Predicated region
    $region26: #{gcn_forward.1} parent=1 // pred_check
      _
    $region27: #{gcn_forward.1} parent=1 // pred_check_branch
      %67 = sbr.rel (0) target = $region29
    $region28: #{gcn_forward.1} parent=1 // pred_region
      %68 = dma.done [#allocation5], 768
    $region29: #{gcn_forward.1} parent=1 // pred_fallthru
      _
    // Predicated region
    $region30: #{gcn_forward.1} parent=1 // pred_check
      _
    $region31: #{gcn_forward.1} parent=1 // pred_check_branch
      %70 = sbr.rel (0) target = $region33
    $region32: #{gcn_forward.1} parent=1 // pred_region
      %71 = dma.done [#allocation5], 6144
    $region33: #{gcn_forward.1} parent=1 // pred_fallthru
      _
    // Predicated region
    $region34: #{gcn_forward.1} parent=1 // pred_check
      _
    $region35: #{gcn_forward.1} parent=1 // pred_check_branch
      %73 = sbr.rel (0) target = $region37
    $region36: #{gcn_forward.1} parent=1 // pred_region
      %74 = dma.done [#allocation8], 10240
    $region37: #{gcn_forward.1} parent=1 // pred_fallthru
      _
    %v75 = vld [vmem:[#allocation2] sm:$0xff]
    %v76 = vld [vmem:[#allocation2 + $0x8] sm:$0xff]
    %v77 = vld [vmem:[#allocation4] sm:$0xff]
    %v78 = vld [vmem:[#allocation4 + $0x8] sm:$0xff]
    %v79 = vld [vmem:[#allocation4 + $0x10] sm:$0xff]
    %v80 = vld [vmem:[#allocation4 + $0x18] sm:$0xff]
    %v81 = vld [vmem:[#allocation4 + $0x20] sm:$0xff]
    %v82 = vld [vmem:[#allocation4 + $0x28] sm:$0xff]
    %v83 = vld [vmem:[#allocation6] sm:$0xff]
    %v84 = vld [vmem:[#allocation6 + $0x8] sm:$0xff]
    %v85 = vld [vmem:[#allocation6 + $0x10] sm:$0xff]
    %v86 = vld [vmem:[#allocation6 + $0x18] sm:$0xff]
    %v87 = vld [vmem:[#allocation6 + $0x20] sm:$0xff]
    %v88 = vld [vmem:[#allocation6 + $0x28] sm:$0xff]
    %v89 = vld [vmem:[#allocation6 + $0x30] sm:$0xff]
    %v90 = vld [vmem:[#allocation6 + $0x38] sm:$0xff]
    %v91 = vld [vmem:[#allocation6 + $0x40] sm:$0xff]
    %v92 = vld [vmem:[#allocation6 + $0x48] sm:$0xff]
    %v93 = vld [vmem:[#allocation6 + $0x50] sm:$0xff]
    %v94 = vld [vmem:[#allocation6 + $0x58] sm:$0xff]
    %v95 = vld [vmem:[#allocation6 + $0x60] sm:$0xff]
    %v96 = vld [vmem:[#allocation6 + $0x68] sm:$0xff]
    %v97 = vld [vmem:[#allocation6 + $0x70] sm:$0xff]
    %v98 = vld [vmem:[#allocation6 + $0x78] sm:$0xff]
    %v99 = vld [vmem:[#allocation6 + $0x80] sm:$0xff]
    %v100 = vld [vmem:[#allocation6 + $0x88] sm:$0xff]
    %v101 = vld [vmem:[#allocation6 + $0x90] sm:$0xff]
    %v102 = vld [vmem:[#allocation6 + $0x98] sm:$0xff]
    %v103 = vld [vmem:[#allocation6 + $0xa0] sm:$0xff]
    %v104 = vld [vmem:[#allocation6 + $0xa8] sm:$0xff]
    %v105 = vld [vmem:[#allocation6 + $0xb0] sm:$0xff]
    %v106 = vld [vmem:[#allocation6 + $0xb8] sm:$0xff]
    %v107 = vld [vmem:[#allocation6 + $0xc0] sm:$0xff]
    %v108 = vld [vmem:[#allocation6 + $0xc8] sm:$0xff]
    %v109 = vld [vmem:[#allocation6 + $0xd0] sm:$0xff]
    %v110 = vld [vmem:[#allocation6 + $0xd8] sm:$0xff]
    %v111 = vld [vmem:[#allocation6 + $0xe0] sm:$0xff]
    %v112 = vld [vmem:[#allocation6 + $0xe8] sm:$0xff]
    %v113 = vld [vmem:[#allocation6 + $0xf0] sm:$0xff]
    %v114 = vld [vmem:[#allocation6 + $0xf8] sm:$0xff]
    %v115 = vld [vmem:[#allocation6 + $0x100] sm:$0xff]
    %v116 = vld [vmem:[#allocation6 + $0x108] sm:$0xff]
    %v117 = vld [vmem:[#allocation6 + $0x110] sm:$0xff]
    %v118 = vld [vmem:[#allocation6 + $0x118] sm:$0xff]
    %v119 = vld [vmem:[#allocation6 + $0x120] sm:$0xff]
    %v120 = vld [vmem:[#allocation6 + $0x128] sm:$0xff]
    %v121 = vld [vmem:[#allocation6 + $0x130] sm:$0xff]
    %v122 = vld [vmem:[#allocation6 + $0x138] sm:$0xff]
    %v123 = vld [vmem:[#allocation6 + $0x140] sm:$0xff]
    %v124 = vld [vmem:[#allocation6 + $0x148] sm:$0xff]
    %v125 = vld [vmem:[#allocation6 + $0x150] sm:$0xff]
    %v126 = vld [vmem:[#allocation6 + $0x158] sm:$0xff]
    %v127 = vld [vmem:[#allocation6 + $0x160] sm:$0xff]
    %v128 = vld [vmem:[#allocation6 + $0x168] sm:$0xff]
    %v129 = vld [vmem:[#allocation6 + $0x170] sm:$0xff]
    %v130 = vld [vmem:[#allocation6 + $0x178] sm:$0xff]
    %131 = vmatprep.subr.mxu0 0.0
    %132 = vmatpush1.msra.mxu0 %v83
    %133 = vmatprep.subr.mxu0 0.0
    %134 = vmatpush1.msra.mxu0 %v84
    %135 = vmatprep.subr.mxu0 0.0
    %136 = vmatpush1.msra.mxu0 %v85
    %137 = vmatprep.subr.mxu0 0.0
    %138 = vmatpush1.msra.mxu0 %v86
    %139 = vmatprep.subr.mxu0 0.0
    %140 = vmatpush1.msra.mxu0 %v87
    %141 = vmatprep.subr.mxu0 0.0
    %142 = vmatpush1.msra.mxu0 %v88
    %143 = vmatprep.subr.mxu0 0.0
    %144 = vmatpush1.msra.mxu0 %v89
    %145 = vmatprep.subr.mxu0 0.0
    %146 = vmatpush1.msra.mxu0 %v90
    %147 = vmatprep.subr.mxu0 0.0
    %148 = vmatpush1.msra.mxu0 %v91
    %149 = vmatprep.subr.mxu0 0.0
    %150 = vmatpush1.msra.mxu0 %v92
    %151 = vmatprep.subr.mxu0 0.0
    %152 = vmatpush1.msra.mxu0 %v93
    %153 = vmatprep.subr.mxu0 0.0
    %154 = vmatpush1.msra.mxu0 %v94
    %155 = vmatprep.subr.mxu0 0.0
    %156 = vmatpush1.msra.mxu0 %v95
    %157 = vmatprep.subr.mxu0 0.0
    %158 = vmatpush1.msra.mxu0 %v96
    %159 = vmatprep.subr.mxu0 0.0
    %160 = vmatpush1.msra.mxu0 %v97
    %161 = vmatprep.subr.mxu0 0.0
    %162 = vmatpush1.msra.mxu0 %v98
    %163 = vmatprep.subr.mxu0 0.0
    %164 = vmatpush1.msra.mxu0 %v99
    %165 = vmatprep.subr.mxu0 0.0
    %166 = vmatpush1.msra.mxu0 %v100
    %167 = vmatprep.subr.mxu0 0.0
    %168 = vmatpush1.msra.mxu0 %v101
    %169 = vmatprep.subr.mxu0 0.0
    %170 = vmatpush1.msra.mxu0 %v102
    %171 = vmatprep.subr.mxu0 0.0
    %172 = vmatpush1.msra.mxu0 %v103
    %173 = vmatprep.subr.mxu0 0.0
    %174 = vmatpush1.msra.mxu0 %v104
    %175 = vmatprep.subr.mxu0 0.0
    %176 = vmatpush1.msra.mxu0 %v105
    %177 = vmatprep.subr.mxu0 0.0
    %178 = vmatpush1.msra.mxu0 %v106
    %179 = vmatprep.subr.mxu0 0.0
    %180 = vmatpush1.msra.mxu0 %v107
    %181 = vmatprep.subr.mxu0 0.0
    %182 = vmatpush1.msra.mxu0 %v108
    %183 = vmatprep.subr.mxu0 0.0
    %184 = vmatpush1.msra.mxu0 %v109
    %185 = vmatprep.subr.mxu0 0.0
    %186 = vmatpush1.msra.mxu0 %v110
    %187 = vmatprep.subr.mxu0 0.0
    %188 = vmatpush1.msra.mxu0 %v111
    %189 = vmatprep.subr.mxu0 0.0
    %190 = vmatpush1.msra.mxu0 %v112
    %191 = vmatprep.subr.mxu0 0.0
    %192 = vmatpush1.msra.mxu0 %v113
    %193 = vmatprep.subr.mxu0 0.0
    %194 = vmatpush1.msra.mxu0 %v114
    %195 = vmatprep.mubr.f32.mxu0 %v78
    %196 = vmatmul.mubr.f32.gmra.mrb[0].mxu0 %v77
    %v197 = vpop.f32.mrb[0].mxu0
    %v198 = vadd.f32 0.0, %v197
    %v199 = vpop.f32.mrb[0].mxu0
    %200 = vmatprep.mubr.f32.mxu0 %v81
    %201 = vmatmul.mubr.f32.gmra.mrb[0].mxu0 %v80
    %v202 = vpop.f32.mrb[0].mxu0
    %v203 = vadd.f32 0.0, %v202
    %v204 = vpop.f32.mrb[0].mxu0
    %205 = vdwg.mxu0
    %206 = vmatprep.subr.mxu0 0.0
    %207 = vmatpush1.msra.mxu0 %v115
    %208 = vmatprep.subr.mxu0 0.0
    %209 = vmatpush1.msra.mxu0 %v116
    %210 = vmatprep.subr.mxu0 0.0
    %211 = vmatpush1.msra.mxu0 %v117
    %212 = vmatprep.subr.mxu0 0.0
    %213 = vmatpush1.msra.mxu0 %v118
    %214 = vmatprep.subr.mxu0 0.0
    %215 = vmatpush1.msra.mxu0 %v119
    %216 = vmatprep.subr.mxu0 0.0
    %217 = vmatpush1.msra.mxu0 %v120
    %218 = vmatprep.subr.mxu0 0.0
    %219 = vmatpush1.msra.mxu0 %v121
    %220 = vmatprep.subr.mxu0 0.0
    %221 = vmatpush1.msra.mxu0 %v122
    %222 = vmatprep.subr.mxu0 0.0
    %223 = vmatpush1.msra.mxu0 %v123
    %224 = vmatprep.subr.mxu0 0.0
    %225 = vmatpush1.msra.mxu0 %v124
    %226 = vmatprep.subr.mxu0 0.0
    %227 = vmatpush1.msra.mxu0 %v125
    %228 = vmatprep.subr.mxu0 0.0
    %229 = vmatpush1.msra.mxu0 %v126
    %230 = vmatprep.subr.mxu0 0.0
    %231 = vmatpush1.msra.mxu0 %v127
    %232 = vmatprep.subr.mxu0 0.0
    %233 = vmatpush1.msra.mxu0 %v128
    %234 = vmatprep.subr.mxu0 0.0
    %235 = vmatpush1.msra.mxu0 %v129
    %236 = vmatprep.subr.mxu0 0.0
    %237 = vmatpush1.msra.mxu0 %v130
    %238 = vmatprep.subr.mxu0 0.0
    %239 = vmatpush1.msra.mxu0 0.0
    %240 = vmatprep.subr.mxu0 0.0
    %241 = vmatpush1.msra.mxu0 0.0
    %242 = vmatprep.subr.mxu0 0.0
    %243 = vmatpush1.msra.mxu0 0.0
    %244 = vmatprep.subr.mxu0 0.0
    %245 = vmatpush1.msra.mxu0 0.0
    %246 = vmatprep.subr.mxu0 0.0
    %247 = vmatpush1.msra.mxu0 0.0
    %248 = vmatprep.subr.mxu0 0.0
    %249 = vmatpush1.msra.mxu0 0.0
    %250 = vmatprep.subr.mxu0 0.0
    %251 = vmatpush1.msra.mxu0 0.0
    %252 = vmatprep.subr.mxu0 0.0
    %253 = vmatpush1.msra.mxu0 0.0
    %254 = vmatprep.subr.mxu0 0.0
    %255 = vmatpush1.msra.mxu0 0.0
    %256 = vmatprep.subr.mxu0 0.0
    %257 = vmatpush1.msra.mxu0 0.0
    %258 = vmatprep.subr.mxu0 0.0
    %259 = vmatpush1.msra.mxu0 0.0
    %260 = vmatprep.subr.mxu0 0.0
    %261 = vmatpush1.msra.mxu0 0.0
    %262 = vmatprep.subr.mxu0 0.0
    %263 = vmatpush1.msra.mxu0 0.0
    %264 = vmatprep.subr.mxu0 0.0
    %265 = vmatpush1.msra.mxu0 0.0
    %266 = vmatprep.subr.mxu0 0.0
    %267 = vmatpush1.msra.mxu0 0.0
    %268 = vmatprep.subr.mxu0 0.0
    %269 = vmatpush1.msra.mxu0 0.0
    %270 = vmatprep.mubr.f32.mxu0 0.0
    %271 = vmatmul.mubr.f32.gmra.mrb[0].mxu0 %v79
    %v272 = vpop.f32.mrb[0].mxu0
    %v273 = vadd.f32 %v198, %v272
    %v274 = vpop.f32.mrb[0].mxu0
    %275 = vmatprep.mubr.f32.mxu0 0.0
    %276 = vmatmul.mubr.f32.gmra.mrb[0].mxu0 %v82
    %v277 = vpop.f32.mrb[0].mxu0
    %v278 = vadd.f32 %v203, %v277
    %v279 = vpop.f32.mrb[0].mxu0
    %280 = vdwg.mxu0
    %v281 = vld [vmem:[%s4] sm:$0x1]
    %v282 = vlaneseq
    %v283 = vshrl.u32 %v282, 7
    %v284 = vsub.s32 0, %v283
    %v285 = vrot.slane %v281, %v284
    %vm286 = vcmask 130048
    %v288 = vsel %vm286, %v75, 0
    %v291 = vsel %vm286, %v76, 0
    %293 = vmatprep.subr.mxu0 0.0
    %294 = vmatpush1.msra.mxu0 %v273
    %295 = vmatprep.subr.mxu0 0.0
    %296 = vmatpush1.msra.mxu0 %v278
    %297 = vmatprep.subr.mxu0 0.0
    %298 = vmatpush1.msra.mxu0 0.0
    %299 = vmatprep.subr.mxu0 0.0
    %300 = vmatpush1.msra.mxu0 0.0
    %301 = vmatprep.subr.mxu0 0.0
    %302 = vmatpush1.msra.mxu0 0.0
    %303 = vmatprep.subr.mxu0 0.0
    %304 = vmatpush1.msra.mxu0 0.0
    %305 = vmatprep.subr.mxu0 0.0
    %306 = vmatpush1.msra.mxu0 0.0
    %307 = vmatprep.subr.mxu0 0.0
    %308 = vmatpush1.msra.mxu0 0.0
    %309 = vmatprep.subr.mxu0 0.0
    %310 = vmatpush1.msra.mxu0 0.0
    %311 = vmatprep.subr.mxu0 0.0
    %312 = vmatpush1.msra.mxu0 0.0
    %313 = vmatprep.subr.mxu0 0.0
    %314 = vmatpush1.msra.mxu0 0.0
    %315 = vmatprep.subr.mxu0 0.0
    %316 = vmatpush1.msra.mxu0 0.0
    %317 = vmatprep.subr.mxu0 0.0
    %318 = vmatpush1.msra.mxu0 0.0
    %319 = vmatprep.subr.mxu0 0.0
    %320 = vmatpush1.msra.mxu0 0.0
    %321 = vmatprep.subr.mxu0 0.0
    %322 = vmatpush1.msra.mxu0 0.0
    %323 = vmatprep.subr.mxu0 0.0
    %324 = vmatpush1.msra.mxu0 0.0
    %325 = vmatprep.subr.mxu0 0.0
    %326 = vmatpush1.msra.mxu0 0.0
    %327 = vmatprep.subr.mxu0 0.0
    %328 = vmatpush1.msra.mxu0 0.0
    %329 = vmatprep.subr.mxu0 0.0
    %330 = vmatpush1.msra.mxu0 0.0
    %331 = vmatprep.subr.mxu0 0.0
    %332 = vmatpush1.msra.mxu0 0.0
    %333 = vmatprep.subr.mxu0 0.0
    %334 = vmatpush1.msra.mxu0 0.0
    %335 = vmatprep.subr.mxu0 0.0
    %336 = vmatpush1.msra.mxu0 0.0
    %337 = vmatprep.subr.mxu0 0.0
    %338 = vmatpush1.msra.mxu0 0.0
    %339 = vmatprep.subr.mxu0 0.0
    %340 = vmatpush1.msra.mxu0 0.0
    %341 = vmatprep.subr.mxu0 0.0
    %342 = vmatpush1.msra.mxu0 0.0
    %343 = vmatprep.subr.mxu0 0.0
    %344 = vmatpush1.msra.mxu0 0.0
    %345 = vmatprep.subr.mxu0 0.0
    %346 = vmatpush1.msra.mxu0 0.0
    %347 = vmatprep.subr.mxu0 0.0
    %348 = vmatpush1.msra.mxu0 0.0
    %349 = vmatprep.subr.mxu0 0.0
    %350 = vmatpush1.msra.mxu0 0.0
    %351 = vmatprep.subr.mxu0 0.0
    %352 = vmatpush1.msra.mxu0 0.0
    %353 = vmatprep.subr.mxu0 0.0
    %354 = vmatpush1.msra.mxu0 0.0
    %355 = vmatprep.subr.mxu0 0.0
    %356 = vmatpush1.msra.mxu0 0.0
    %357 = vmatprep.mubr.f32.mxu0 0.0
    %358 = vmatmul.mubr.f32.gmra.mrb[0].mxu0 %v288
    %v359 = vpop.f32.mrb[0].mxu0
    %v360 = vadd.f32 %v285, %v359
    %v361 = vpop.f32.mrb[0].mxu0
    %362 = vmatprep.mubr.f32.mxu0 0.0
    %363 = vmatmul.mubr.f32.gmra.mrb[0].mxu0 %v291
    %v364 = vpop.f32.mrb[0].mxu0
    %v365 = vadd.f32 %v285, %v364
    %v366 = vpop.f32.mrb[0].mxu0
    %367 = vdwg.mxu0
    %v368 = vmax.f32 %v360, 0.0
    %v369 = vmax.f32 %v365, 0.0
    %v370 = vld [vmem:[#allocation7] sm:$0xff]
    %v371 = vld [vmem:[#allocation7 + $0x8] sm:$0xff]
    %v372 = vld [vmem:[#allocation7 + $0x10] sm:$0xff]
    %v373 = vld [vmem:[#allocation7 + $0x18] sm:$0xff]
    %v374 = vld [vmem:[#allocation7 + $0x20] sm:$0xff]
    %v375 = vld [vmem:[#allocation7 + $0x28] sm:$0xff]
    %v376 = vld [vmem:[#allocation7 + $0x30] sm:$0xff]
    %v377 = vld [vmem:[#allocation7 + $0x38] sm:$0xff]
    %v378 = vld [vmem:[#allocation7 + $0x40] sm:$0xff]
    %v379 = vld [vmem:[#allocation7 + $0x48] sm:$0xff]
    %v380 = vld [vmem:[#allocation7 + $0x50] sm:$0xff]
    %v381 = vld [vmem:[#allocation7 + $0x58] sm:$0xff]
    %v382 = vld [vmem:[#allocation7 + $0x60] sm:$0xff]
    %v383 = vld [vmem:[#allocation7 + $0x68] sm:$0xff]
    %v384 = vld [vmem:[#allocation7 + $0x70] sm:$0xff]
    %v385 = vld [vmem:[#allocation7 + $0x78] sm:$0xff]
    %386 = vmatprep.subr.mxu0 0.0
    %387 = vmatpush1.msra.mxu0 %v370
    %388 = vmatprep.subr.mxu0 0.0
    %389 = vmatpush1.msra.mxu0 %v371
    %390 = vmatprep.subr.mxu0 0.0
    %391 = vmatpush1.msra.mxu0 %v372
    %392 = vmatprep.subr.mxu0 0.0
    %393 = vmatpush1.msra.mxu0 %v373
    %394 = vmatprep.subr.mxu0 0.0
    %395 = vmatpush1.msra.mxu0 %v374
    %396 = vmatprep.subr.mxu0 0.0
    %397 = vmatpush1.msra.mxu0 %v375
    %398 = vmatprep.subr.mxu0 0.0
    %399 = vmatpush1.msra.mxu0 %v376
    %400 = vmatprep.subr.mxu0 0.0
    %401 = vmatpush1.msra.mxu0 %v377
    %402 = vmatprep.subr.mxu0 0.0
    %403 = vmatpush1.msra.mxu0 %v378
    %404 = vmatprep.subr.mxu0 0.0
    %405 = vmatpush1.msra.mxu0 %v379
    %406 = vmatprep.subr.mxu0 0.0
    %407 = vmatpush1.msra.mxu0 %v380
    %408 = vmatprep.subr.mxu0 0.0
    %409 = vmatpush1.msra.mxu0 %v381
    %410 = vmatprep.subr.mxu0 0.0
    %411 = vmatpush1.msra.mxu0 %v382
    %412 = vmatprep.subr.mxu0 0.0
    %413 = vmatpush1.msra.mxu0 %v383
    %414 = vmatprep.subr.mxu0 0.0
    %415 = vmatpush1.msra.mxu0 %v384
    %416 = vmatprep.subr.mxu0 0.0
    %417 = vmatpush1.msra.mxu0 %v385
    %418 = vmatprep.subr.mxu0 0.0
    %419 = vmatpush1.msra.mxu0 0.0
    %420 = vmatprep.subr.mxu0 0.0
    %421 = vmatpush1.msra.mxu0 0.0
    %422 = vmatprep.subr.mxu0 0.0
    %423 = vmatpush1.msra.mxu0 0.0
    %424 = vmatprep.subr.mxu0 0.0
    %425 = vmatpush1.msra.mxu0 0.0
    %426 = vmatprep.subr.mxu0 0.0
    %427 = vmatpush1.msra.mxu0 0.0
    %428 = vmatprep.subr.mxu0 0.0
    %429 = vmatpush1.msra.mxu0 0.0
    %430 = vmatprep.subr.mxu0 0.0
    %431 = vmatpush1.msra.mxu0 0.0
    %432 = vmatprep.subr.mxu0 0.0
    %433 = vmatpush1.msra.mxu0 0.0
    %434 = vmatprep.subr.mxu0 0.0
    %435 = vmatpush1.msra.mxu0 0.0
    %436 = vmatprep.subr.mxu0 0.0
    %437 = vmatpush1.msra.mxu0 0.0
    %438 = vmatprep.subr.mxu0 0.0
    %439 = vmatpush1.msra.mxu0 0.0
    %440 = vmatprep.subr.mxu0 0.0
    %441 = vmatpush1.msra.mxu0 0.0
    %442 = vmatprep.subr.mxu0 0.0
    %443 = vmatpush1.msra.mxu0 0.0
    %444 = vmatprep.subr.mxu0 0.0
    %445 = vmatpush1.msra.mxu0 0.0
    %446 = vmatprep.subr.mxu0 0.0
    %447 = vmatpush1.msra.mxu0 0.0
    %448 = vmatprep.subr.mxu0 0.0
    %449 = vmatpush1.msra.mxu0 0.0
    %450 = vmatprep.mubr.f32.mxu0 0.0
    %451 = vmatmul.mubr.f32.gmra.mrb[0].mxu0 %v368
    %v452 = vpop.f32.mrb[0].mxu0
    %v453 = vadd.f32 0.0, %v452
    %v454 = vpop.f32.mrb[0].mxu0
    %455 = vmatprep.mubr.f32.mxu0 0.0
    %456 = vmatmul.mubr.f32.gmra.mrb[0].mxu0 %v369
    %v457 = vpop.f32.mrb[0].mxu0
    %v458 = vadd.f32 0.0, %v457
    %v459 = vpop.f32.mrb[0].mxu0
    %460 = vdwg.mxu0
    %v461 = vld [vmem:[%s4 + $0x1] sm:$0x1]
    %v462 = vlaneseq
    %v463 = vshrl.u32 %v462, 7
    %v464 = vsub.s32 0, %v463
    %v465 = vrot.slane %v461, %v464
    %466 = vmatprep.subr.mxu0 0.0
    %467 = vmatpush1.msra.mxu0 %v453
    %468 = vmatprep.subr.mxu0 0.0
    %469 = vmatpush1.msra.mxu0 %v458
    %470 = vmatprep.subr.mxu0 0.0
    %471 = vmatpush1.msra.mxu0 0.0
    %472 = vmatprep.subr.mxu0 0.0
    %473 = vmatpush1.msra.mxu0 0.0
    %474 = vmatprep.subr.mxu0 0.0
    %475 = vmatpush1.msra.mxu0 0.0
    %476 = vmatprep.subr.mxu0 0.0
    %477 = vmatpush1.msra.mxu0 0.0
    %478 = vmatprep.subr.mxu0 0.0
    %479 = vmatpush1.msra.mxu0 0.0
    %480 = vmatprep.subr.mxu0 0.0
    %481 = vmatpush1.msra.mxu0 0.0
    %482 = vmatprep.subr.mxu0 0.0
    %483 = vmatpush1.msra.mxu0 0.0
    %484 = vmatprep.subr.mxu0 0.0
    %485 = vmatpush1.msra.mxu0 0.0
    %486 = vmatprep.subr.mxu0 0.0
    %487 = vmatpush1.msra.mxu0 0.0
    %488 = vmatprep.subr.mxu0 0.0
    %489 = vmatpush1.msra.mxu0 0.0
    %490 = vmatprep.subr.mxu0 0.0
    %491 = vmatpush1.msra.mxu0 0.0
    %492 = vmatprep.subr.mxu0 0.0
    %493 = vmatpush1.msra.mxu0 0.0
    %494 = vmatprep.subr.mxu0 0.0
    %495 = vmatpush1.msra.mxu0 0.0
    %496 = vmatprep.subr.mxu0 0.0
    %497 = vmatpush1.msra.mxu0 0.0
    %498 = vmatprep.subr.mxu0 0.0
    %499 = vmatpush1.msra.mxu0 0.0
    %500 = vmatprep.subr.mxu0 0.0
    %501 = vmatpush1.msra.mxu0 0.0
    %502 = vmatprep.subr.mxu0 0.0
    %503 = vmatpush1.msra.mxu0 0.0
    %504 = vmatprep.subr.mxu0 0.0
    %505 = vmatpush1.msra.mxu0 0.0
    %506 = vmatprep.subr.mxu0 0.0
    %507 = vmatpush1.msra.mxu0 0.0
    %508 = vmatprep.subr.mxu0 0.0
    %509 = vmatpush1.msra.mxu0 0.0
    %510 = vmatprep.subr.mxu0 0.0
    %511 = vmatpush1.msra.mxu0 0.0
    %512 = vmatprep.subr.mxu0 0.0
    %513 = vmatpush1.msra.mxu0 0.0
    %514 = vmatprep.subr.mxu0 0.0
    %515 = vmatpush1.msra.mxu0 0.0
    %516 = vmatprep.subr.mxu0 0.0
    %517 = vmatpush1.msra.mxu0 0.0
    %518 = vmatprep.subr.mxu0 0.0
    %519 = vmatpush1.msra.mxu0 0.0
    %520 = vmatprep.subr.mxu0 0.0
    %521 = vmatpush1.msra.mxu0 0.0
    %522 = vmatprep.subr.mxu0 0.0
    %523 = vmatpush1.msra.mxu0 0.0
    %524 = vmatprep.subr.mxu0 0.0
    %525 = vmatpush1.msra.mxu0 0.0
    %526 = vmatprep.subr.mxu0 0.0
    %527 = vmatpush1.msra.mxu0 0.0
    %528 = vmatprep.subr.mxu0 0.0
    %529 = vmatpush1.msra.mxu0 0.0
    %530 = vmatprep.mubr.f32.mxu0 0.0
    %531 = vmatmul.mubr.f32.gmra.mrb[0].mxu0 %v288
    %v532 = vpop.f32.mrb[0].mxu0
    %v533 = vadd.f32 %v465, %v532
    %v534 = vpop.f32.mrb[0].mxu0
    %535 = vmatprep.mubr.f32.mxu0 0.0
    %536 = vmatmul.mubr.f32.gmra.mrb[0].mxu0 %v291
    %v537 = vpop.f32.mrb[0].mxu0
    %v538 = vadd.f32 %v465, %v537
    %v539 = vpop.f32.mrb[0].mxu0
    %540 = vdwg.mxu0
    %v541 = vmax.f32 %v533, 0.0
    %v542 = vmax.f32 %v538, 0.0
    %s543 = scalar_lea.vmem [#allocation7], 128
    %v544 = vld [vmem:[%s543] sm:$0xff]
    %v545 = vld [vmem:[%s543 + $0x8] sm:$0xff]
    %v546 = vld [vmem:[%s543 + $0x10] sm:$0xff]
    %v547 = vld [vmem:[%s543 + $0x18] sm:$0xff]
    %v548 = vld [vmem:[%s543 + $0x20] sm:$0xff]
    %v549 = vld [vmem:[%s543 + $0x28] sm:$0xff]
    %v550 = vld [vmem:[%s543 + $0x30] sm:$0xff]
    %v551 = vld [vmem:[%s543 + $0x38] sm:$0xff]
    %v552 = vld [vmem:[%s543 + $0x40] sm:$0xff]
    %v553 = vld [vmem:[%s543 + $0x48] sm:$0xff]
    %v554 = vld [vmem:[%s543 + $0x50] sm:$0xff]
    %v555 = vld [vmem:[%s543 + $0x58] sm:$0xff]
    %v556 = vld [vmem:[%s543 + $0x60] sm:$0xff]
    %v557 = vld [vmem:[%s543 + $0x68] sm:$0xff]
    %v558 = vld [vmem:[%s543 + $0x70] sm:$0xff]
    %v559 = vld [vmem:[%s543 + $0x78] sm:$0xff]
    %560 = vmatprep.subr.mxu0 0.0
    %561 = vmatpush1.msra.mxu0 %v544
    %562 = vmatprep.subr.mxu0 0.0
    %563 = vmatpush1.msra.mxu0 %v545
    %564 = vmatprep.subr.mxu0 0.0
    %565 = vmatpush1.msra.mxu0 %v546
    %566 = vmatprep.subr.mxu0 0.0
    %567 = vmatpush1.msra.mxu0 %v547
    %568 = vmatprep.subr.mxu0 0.0
    %569 = vmatpush1.msra.mxu0 %v548
    %570 = vmatprep.subr.mxu0 0.0
    %571 = vmatpush1.msra.mxu0 %v549
    %572 = vmatprep.subr.mxu0 0.0
    %573 = vmatpush1.msra.mxu0 %v550
    %574 = vmatprep.subr.mxu0 0.0
    %575 = vmatpush1.msra.mxu0 %v551
    %576 = vmatprep.subr.mxu0 0.0
    %577 = vmatpush1.msra.mxu0 %v552
    %578 = vmatprep.subr.mxu0 0.0
    %579 = vmatpush1.msra.mxu0 %v553
    %580 = vmatprep.subr.mxu0 0.0
    %581 = vmatpush1.msra.mxu0 %v554
    %582 = vmatprep.subr.mxu0 0.0
    %583 = vmatpush1.msra.mxu0 %v555
    %584 = vmatprep.subr.mxu0 0.0
    %585 = vmatpush1.msra.mxu0 %v556
    %586 = vmatprep.subr.mxu0 0.0
    %587 = vmatpush1.msra.mxu0 %v557
    %588 = vmatprep.subr.mxu0 0.0
    %589 = vmatpush1.msra.mxu0 %v558
    %590 = vmatprep.subr.mxu0 0.0
    %591 = vmatpush1.msra.mxu0 %v559
    %592 = vmatprep.subr.mxu0 0.0
    %593 = vmatpush1.msra.mxu0 0.0
    %594 = vmatprep.subr.mxu0 0.0
    %595 = vmatpush1.msra.mxu0 0.0
    %596 = vmatprep.subr.mxu0 0.0
    %597 = vmatpush1.msra.mxu0 0.0
    %598 = vmatprep.subr.mxu0 0.0
    %599 = vmatpush1.msra.mxu0 0.0
    %600 = vmatprep.subr.mxu0 0.0
    %601 = vmatpush1.msra.mxu0 0.0
    %602 = vmatprep.subr.mxu0 0.0
    %603 = vmatpush1.msra.mxu0 0.0
    %604 = vmatprep.subr.mxu0 0.0
    %605 = vmatpush1.msra.mxu0 0.0
    %606 = vmatprep.subr.mxu0 0.0
    %607 = vmatpush1.msra.mxu0 0.0
    %608 = vmatprep.subr.mxu0 0.0
    %609 = vmatpush1.msra.mxu0 0.0
    %610 = vmatprep.subr.mxu0 0.0
    %611 = vmatpush1.msra.mxu0 0.0
    %612 = vmatprep.subr.mxu0 0.0
    %613 = vmatpush1.msra.mxu0 0.0
    %614 = vmatprep.subr.mxu0 0.0
    %615 = vmatpush1.msra.mxu0 0.0
    %616 = vmatprep.subr.mxu0 0.0
    %617 = vmatpush1.msra.mxu0 0.0
    %618 = vmatprep.subr.mxu0 0.0
    %619 = vmatpush1.msra.mxu0 0.0
    %620 = vmatprep.subr.mxu0 0.0
    %621 = vmatpush1.msra.mxu0 0.0
    %622 = vmatprep.subr.mxu0 0.0
    %623 = vmatpush1.msra.mxu0 0.0
    %624 = vmatprep.mubr.f32.mxu0 0.0
    %625 = vmatmul.mubr.f32.gmra.mrb[0].mxu0 %v541
    %v626 = vpop.f32.mrb[0].mxu0
    %v627 = vadd.f32 0.0, %v626
    %v628 = vpop.f32.mrb[0].mxu0
    %629 = vmatprep.mubr.f32.mxu0 0.0
    %630 = vmatmul.mubr.f32.gmra.mrb[0].mxu0 %v542
    %v631 = vpop.f32.mrb[0].mxu0
    %v632 = vadd.f32 0.0, %v631
    %v633 = vpop.f32.mrb[0].mxu0
    %634 = vdwg.mxu0
    %v635 = vld [vmem:[%s4 + $0x2] sm:$0x1]
    %v636 = vlaneseq
    %v637 = vshrl.u32 %v636, 7
    %v638 = vsub.s32 0, %v637
    %v639 = vrot.slane %v635, %v638
    %640 = vmatprep.subr.mxu0 0.0
    %641 = vmatpush1.msra.mxu0 %v627
    %642 = vmatprep.subr.mxu0 0.0
    %643 = vmatpush1.msra.mxu0 %v632
    %644 = vmatprep.subr.mxu0 0.0
    %645 = vmatpush1.msra.mxu0 0.0
    %646 = vmatprep.subr.mxu0 0.0
    %647 = vmatpush1.msra.mxu0 0.0
    %648 = vmatprep.subr.mxu0 0.0
    %649 = vmatpush1.msra.mxu0 0.0
    %650 = vmatprep.subr.mxu0 0.0
    %651 = vmatpush1.msra.mxu0 0.0
    %652 = vmatprep.subr.mxu0 0.0
    %653 = vmatpush1.msra.mxu0 0.0
    %654 = vmatprep.subr.mxu0 0.0
    %655 = vmatpush1.msra.mxu0 0.0
    %656 = vmatprep.subr.mxu0 0.0
    %657 = vmatpush1.msra.mxu0 0.0
    %658 = vmatprep.subr.mxu0 0.0
    %659 = vmatpush1.msra.mxu0 0.0
    %660 = vmatprep.subr.mxu0 0.0
    %661 = vmatpush1.msra.mxu0 0.0
    %662 = vmatprep.subr.mxu0 0.0
    %663 = vmatpush1.msra.mxu0 0.0
    %664 = vmatprep.subr.mxu0 0.0
    %665 = vmatpush1.msra.mxu0 0.0
    %666 = vmatprep.subr.mxu0 0.0
    %667 = vmatpush1.msra.mxu0 0.0
    %668 = vmatprep.subr.mxu0 0.0
    %669 = vmatpush1.msra.mxu0 0.0
    %670 = vmatprep.subr.mxu0 0.0
    %671 = vmatpush1.msra.mxu0 0.0
    %672 = vmatprep.subr.mxu0 0.0
    %673 = vmatpush1.msra.mxu0 0.0
    %674 = vmatprep.subr.mxu0 0.0
    %675 = vmatpush1.msra.mxu0 0.0
    %676 = vmatprep.subr.mxu0 0.0
    %677 = vmatpush1.msra.mxu0 0.0
    %678 = vmatprep.subr.mxu0 0.0
    %679 = vmatpush1.msra.mxu0 0.0
    %680 = vmatprep.subr.mxu0 0.0
    %681 = vmatpush1.msra.mxu0 0.0
    %682 = vmatprep.subr.mxu0 0.0
    %683 = vmatpush1.msra.mxu0 0.0
    %684 = vmatprep.subr.mxu0 0.0
    %685 = vmatpush1.msra.mxu0 0.0
    %686 = vmatprep.subr.mxu0 0.0
    %687 = vmatpush1.msra.mxu0 0.0
    %688 = vmatprep.subr.mxu0 0.0
    %689 = vmatpush1.msra.mxu0 0.0
    %690 = vmatprep.subr.mxu0 0.0
    %691 = vmatpush1.msra.mxu0 0.0
    %692 = vmatprep.subr.mxu0 0.0
    %693 = vmatpush1.msra.mxu0 0.0
    %694 = vmatprep.subr.mxu0 0.0
    %695 = vmatpush1.msra.mxu0 0.0
    %696 = vmatprep.subr.mxu0 0.0
    %697 = vmatpush1.msra.mxu0 0.0
    %698 = vmatprep.subr.mxu0 0.0
    %699 = vmatpush1.msra.mxu0 0.0
    %700 = vmatprep.subr.mxu0 0.0
    %701 = vmatpush1.msra.mxu0 0.0
    %702 = vmatprep.subr.mxu0 0.0
    %703 = vmatpush1.msra.mxu0 0.0
    %704 = vmatprep.mubr.f32.mxu0 0.0
    %705 = vmatmul.mubr.f32.gmra.mrb[0].mxu0 %v288
    %v706 = vpop.f32.mrb[0].mxu0
    %v707 = vadd.f32 %v639, %v706
    %v708 = vpop.f32.mrb[0].mxu0
    %709 = vmatprep.mubr.f32.mxu0 0.0
    %710 = vmatmul.mubr.f32.gmra.mrb[0].mxu0 %v291
    %v711 = vpop.f32.mrb[0].mxu0
    %v712 = vadd.f32 %v639, %v711
    %v713 = vpop.f32.mrb[0].mxu0
    %714 = vdwg.mxu0
    %v715 = vmax.f32 %v707, 0.0
    %v716 = vmax.f32 %v712, 0.0
    %s717 = scalar_lea.vmem [#allocation7], 256
    %v718 = vld [vmem:[%s717] sm:$0xff]
    %v719 = vld [vmem:[%s717 + $0x8] sm:$0xff]
    %v720 = vld [vmem:[%s717 + $0x10] sm:$0xff]
    %v721 = vld [vmem:[%s717 + $0x18] sm:$0xff]
    %v722 = vld [vmem:[%s717 + $0x20] sm:$0xff]
    %v723 = vld [vmem:[%s717 + $0x28] sm:$0xff]
    %v724 = vld [vmem:[%s717 + $0x30] sm:$0xff]
    %v725 = vld [vmem:[%s717 + $0x38] sm:$0xff]
    %v726 = vld [vmem:[%s717 + $0x40] sm:$0xff]
    %v727 = vld [vmem:[%s717 + $0x48] sm:$0xff]
    %v728 = vld [vmem:[%s717 + $0x50] sm:$0xff]
    %v729 = vld [vmem:[%s717 + $0x58] sm:$0xff]
    %v730 = vld [vmem:[%s717 + $0x60] sm:$0xff]
    %v731 = vld [vmem:[%s717 + $0x68] sm:$0xff]
    %v732 = vld [vmem:[%s717 + $0x70] sm:$0xff]
    %v733 = vld [vmem:[%s717 + $0x78] sm:$0xff]
    %734 = vmatprep.subr.mxu0 0.0
    %735 = vmatpush1.msra.mxu0 %v718
    %736 = vmatprep.subr.mxu0 0.0
    %737 = vmatpush1.msra.mxu0 %v719
    %738 = vmatprep.subr.mxu0 0.0
    %739 = vmatpush1.msra.mxu0 %v720
    %740 = vmatprep.subr.mxu0 0.0
    %741 = vmatpush1.msra.mxu0 %v721
    %742 = vmatprep.subr.mxu0 0.0
    %743 = vmatpush1.msra.mxu0 %v722
    %744 = vmatprep.subr.mxu0 0.0
    %745 = vmatpush1.msra.mxu0 %v723
    %746 = vmatprep.subr.mxu0 0.0
    %747 = vmatpush1.msra.mxu0 %v724
    %748 = vmatprep.subr.mxu0 0.0
    %749 = vmatpush1.msra.mxu0 %v725
    %750 = vmatprep.subr.mxu0 0.0
    %751 = vmatpush1.msra.mxu0 %v726
    %752 = vmatprep.subr.mxu0 0.0
    %753 = vmatpush1.msra.mxu0 %v727
    %754 = vmatprep.subr.mxu0 0.0
    %755 = vmatpush1.msra.mxu0 %v728
    %756 = vmatprep.subr.mxu0 0.0
    %757 = vmatpush1.msra.mxu0 %v729
    %758 = vmatprep.subr.mxu0 0.0
    %759 = vmatpush1.msra.mxu0 %v730
    %760 = vmatprep.subr.mxu0 0.0
    %761 = vmatpush1.msra.mxu0 %v731
    %762 = vmatprep.subr.mxu0 0.0
    %763 = vmatpush1.msra.mxu0 %v732
    %764 = vmatprep.subr.mxu0 0.0
    %765 = vmatpush1.msra.mxu0 %v733
    %766 = vmatprep.subr.mxu0 0.0
    %767 = vmatpush1.msra.mxu0 0.0
    %768 = vmatprep.subr.mxu0 0.0
    %769 = vmatpush1.msra.mxu0 0.0
    %770 = vmatprep.subr.mxu0 0.0
    %771 = vmatpush1.msra.mxu0 0.0
    %772 = vmatprep.subr.mxu0 0.0
    %773 = vmatpush1.msra.mxu0 0.0
    %774 = vmatprep.subr.mxu0 0.0
    %775 = vmatpush1.msra.mxu0 0.0
    %776 = vmatprep.subr.mxu0 0.0
    %777 = vmatpush1.msra.mxu0 0.0
    %778 = vmatprep.subr.mxu0 0.0
    %779 = vmatpush1.msra.mxu0 0.0
    %780 = vmatprep.subr.mxu0 0.0
    %781 = vmatpush1.msra.mxu0 0.0
    %782 = vmatprep.subr.mxu0 0.0
    %783 = vmatpush1.msra.mxu0 0.0
    %784 = vmatprep.subr.mxu0 0.0
    %785 = vmatpush1.msra.mxu0 0.0
    %786 = vmatprep.subr.mxu0 0.0
    %787 = vmatpush1.msra.mxu0 0.0
    %788 = vmatprep.subr.mxu0 0.0
    %789 = vmatpush1.msra.mxu0 0.0
    %790 = vmatprep.subr.mxu0 0.0
    %791 = vmatpush1.msra.mxu0 0.0
    %792 = vmatprep.subr.mxu0 0.0
    %793 = vmatpush1.msra.mxu0 0.0
    %794 = vmatprep.subr.mxu0 0.0
    %795 = vmatpush1.msra.mxu0 0.0
    %796 = vmatprep.subr.mxu0 0.0
    %797 = vmatpush1.msra.mxu0 0.0
    %798 = vmatprep.mubr.f32.mxu0 0.0
    %799 = vmatmul.mubr.f32.gmra.mrb[0].mxu0 %v715
    %v800 = vpop.f32.mrb[0].mxu0
    %v801 = vadd.f32 0.0, %v800
    %v802 = vpop.f32.mrb[0].mxu0
    %803 = vmatprep.mubr.f32.mxu0 0.0
    %804 = vmatmul.mubr.f32.gmra.mrb[0].mxu0 %v716
    %v805 = vpop.f32.mrb[0].mxu0
    %v806 = vadd.f32 0.0, %v805
    %v807 = vpop.f32.mrb[0].mxu0
    %808 = vdwg.mxu0
    %v809 = vld [vmem:[%s4 + $0x3] sm:$0x1]
    %v810 = vlaneseq
    %v811 = vshrl.u32 %v810, 7
    %v812 = vsub.s32 0, %v811
    %v813 = vrot.slane %v809, %v812
    %814 = vmatprep.subr.mxu0 0.0
    %815 = vmatpush1.msra.mxu0 %v801
    %816 = vmatprep.subr.mxu0 0.0
    %817 = vmatpush1.msra.mxu0 %v806
    %818 = vmatprep.subr.mxu0 0.0
    %819 = vmatpush1.msra.mxu0 0.0
    %820 = vmatprep.subr.mxu0 0.0
    %821 = vmatpush1.msra.mxu0 0.0
    %822 = vmatprep.subr.mxu0 0.0
    %823 = vmatpush1.msra.mxu0 0.0
    %824 = vmatprep.subr.mxu0 0.0
    %825 = vmatpush1.msra.mxu0 0.0
    %826 = vmatprep.subr.mxu0 0.0
    %827 = vmatpush1.msra.mxu0 0.0
    %828 = vmatprep.subr.mxu0 0.0
    %829 = vmatpush1.msra.mxu0 0.0
    %830 = vmatprep.subr.mxu0 0.0
    %831 = vmatpush1.msra.mxu0 0.0
    %832 = vmatprep.subr.mxu0 0.0
    %833 = vmatpush1.msra.mxu0 0.0
    %834 = vmatprep.subr.mxu0 0.0
    %835 = vmatpush1.msra.mxu0 0.0
    %836 = vmatprep.subr.mxu0 0.0
    %837 = vmatpush1.msra.mxu0 0.0
    %838 = vmatprep.subr.mxu0 0.0
    %839 = vmatpush1.msra.mxu0 0.0
    %840 = vmatprep.subr.mxu0 0.0
    %841 = vmatpush1.msra.mxu0 0.0
    %842 = vmatprep.subr.mxu0 0.0
    %843 = vmatpush1.msra.mxu0 0.0
    %844 = vmatprep.subr.mxu0 0.0
    %845 = vmatpush1.msra.mxu0 0.0
    %846 = vmatprep.subr.mxu0 0.0
    %847 = vmatpush1.msra.mxu0 0.0
    %848 = vmatprep.subr.mxu0 0.0
    %849 = vmatpush1.msra.mxu0 0.0
    %850 = vmatprep.subr.mxu0 0.0
    %851 = vmatpush1.msra.mxu0 0.0
    %852 = vmatprep.subr.mxu0 0.0
    %853 = vmatpush1.msra.mxu0 0.0
    %854 = vmatprep.subr.mxu0 0.0
    %855 = vmatpush1.msra.mxu0 0.0
    %856 = vmatprep.subr.mxu0 0.0
    %857 = vmatpush1.msra.mxu0 0.0
    %858 = vmatprep.subr.mxu0 0.0
    %859 = vmatpush1.msra.mxu0 0.0
    %860 = vmatprep.subr.mxu0 0.0
    %861 = vmatpush1.msra.mxu0 0.0
    %862 = vmatprep.subr.mxu0 0.0
    %863 = vmatpush1.msra.mxu0 0.0
    %864 = vmatprep.subr.mxu0 0.0
    %865 = vmatpush1.msra.mxu0 0.0
    %866 = vmatprep.subr.mxu0 0.0
    %867 = vmatpush1.msra.mxu0 0.0
    %868 = vmatprep.subr.mxu0 0.0
    %869 = vmatpush1.msra.mxu0 0.0
    %870 = vmatprep.subr.mxu0 0.0
    %871 = vmatpush1.msra.mxu0 0.0
    %872 = vmatprep.subr.mxu0 0.0
    %873 = vmatpush1.msra.mxu0 0.0
    %874 = vmatprep.subr.mxu0 0.0
    %875 = vmatpush1.msra.mxu0 0.0
    %876 = vmatprep.subr.mxu0 0.0
    %877 = vmatpush1.msra.mxu0 0.0
    %878 = vmatprep.mubr.f32.mxu0 0.0
    %879 = vmatmul.mubr.f32.gmra.mrb[0].mxu0 %v288
    %v880 = vpop.f32.mrb[0].mxu0
    %v881 = vadd.f32 %v813, %v880
    %v882 = vpop.f32.mrb[0].mxu0
    %883 = vmatprep.mubr.f32.mxu0 0.0
    %884 = vmatmul.mubr.f32.gmra.mrb[0].mxu0 %v291
    %v885 = vpop.f32.mrb[0].mxu0
    %v886 = vadd.f32 %v813, %v885
    %v887 = vpop.f32.mrb[0].mxu0
    %888 = vdwg.mxu0
    %v889 = vmax.f32 %v881, 0.0
    %v890 = vmax.f32 %v886, 0.0
    %s891 = scalar_lea.vmem [#allocation7], 384
    %v892 = vld [vmem:[%s891] sm:$0xff]
    %v893 = vld [vmem:[%s891 + $0x8] sm:$0xff]
    %v894 = vld [vmem:[%s891 + $0x10] sm:$0xff]
    %v895 = vld [vmem:[%s891 + $0x18] sm:$0xff]
    %v896 = vld [vmem:[%s891 + $0x20] sm:$0xff]
    %v897 = vld [vmem:[%s891 + $0x28] sm:$0xff]
    %v898 = vld [vmem:[%s891 + $0x30] sm:$0xff]
    %v899 = vld [vmem:[%s891 + $0x38] sm:$0xff]
    %v900 = vld [vmem:[%s891 + $0x40] sm:$0xff]
    %v901 = vld [vmem:[%s891 + $0x48] sm:$0xff]
    %v902 = vld [vmem:[%s891 + $0x50] sm:$0xff]
    %v903 = vld [vmem:[%s891 + $0x58] sm:$0xff]
    %v904 = vld [vmem:[%s891 + $0x60] sm:$0xff]
    %v905 = vld [vmem:[%s891 + $0x68] sm:$0xff]
    %v906 = vld [vmem:[%s891 + $0x70] sm:$0xff]
    %v907 = vld [vmem:[%s891 + $0x78] sm:$0xff]
    %908 = vmatprep.subr.mxu0 0.0
    %909 = vmatpush1.msra.mxu0 %v892
    %910 = vmatprep.subr.mxu0 0.0
    %911 = vmatpush1.msra.mxu0 %v893
    %912 = vmatprep.subr.mxu0 0.0
    %913 = vmatpush1.msra.mxu0 %v894
    %914 = vmatprep.subr.mxu0 0.0
    %915 = vmatpush1.msra.mxu0 %v895
    %916 = vmatprep.subr.mxu0 0.0
    %917 = vmatpush1.msra.mxu0 %v896
    %918 = vmatprep.subr.mxu0 0.0
    %919 = vmatpush1.msra.mxu0 %v897
    %920 = vmatprep.subr.mxu0 0.0
    %921 = vmatpush1.msra.mxu0 %v898
    %922 = vmatprep.subr.mxu0 0.0
    %923 = vmatpush1.msra.mxu0 %v899
    %924 = vmatprep.subr.mxu0 0.0
    %925 = vmatpush1.msra.mxu0 %v900
    %926 = vmatprep.subr.mxu0 0.0
    %927 = vmatpush1.msra.mxu0 %v901
    %928 = vmatprep.subr.mxu0 0.0
    %929 = vmatpush1.msra.mxu0 %v902
    %930 = vmatprep.subr.mxu0 0.0
    %931 = vmatpush1.msra.mxu0 %v903
    %932 = vmatprep.subr.mxu0 0.0
    %933 = vmatpush1.msra.mxu0 %v904
    %934 = vmatprep.subr.mxu0 0.0
    %935 = vmatpush1.msra.mxu0 %v905
    %936 = vmatprep.subr.mxu0 0.0
    %937 = vmatpush1.msra.mxu0 %v906
    %938 = vmatprep.subr.mxu0 0.0
    %939 = vmatpush1.msra.mxu0 %v907
    %940 = vmatprep.subr.mxu0 0.0
    %941 = vmatpush1.msra.mxu0 0.0
    %942 = vmatprep.subr.mxu0 0.0
    %943 = vmatpush1.msra.mxu0 0.0
    %944 = vmatprep.subr.mxu0 0.0
    %945 = vmatpush1.msra.mxu0 0.0
    %946 = vmatprep.subr.mxu0 0.0
    %947 = vmatpush1.msra.mxu0 0.0
    %948 = vmatprep.subr.mxu0 0.0
    %949 = vmatpush1.msra.mxu0 0.0
    %950 = vmatprep.subr.mxu0 0.0
    %951 = vmatpush1.msra.mxu0 0.0
    %952 = vmatprep.subr.mxu0 0.0
    %953 = vmatpush1.msra.mxu0 0.0
    %954 = vmatprep.subr.mxu0 0.0
    %955 = vmatpush1.msra.mxu0 0.0
    %956 = vmatprep.subr.mxu0 0.0
    %957 = vmatpush1.msra.mxu0 0.0
    %958 = vmatprep.subr.mxu0 0.0
    %959 = vmatpush1.msra.mxu0 0.0
    %960 = vmatprep.subr.mxu0 0.0
    %961 = vmatpush1.msra.mxu0 0.0
    %962 = vmatprep.subr.mxu0 0.0
    %963 = vmatpush1.msra.mxu0 0.0
    %964 = vmatprep.subr.mxu0 0.0
    %965 = vmatpush1.msra.mxu0 0.0
    %966 = vmatprep.subr.mxu0 0.0
    %967 = vmatpush1.msra.mxu0 0.0
    %968 = vmatprep.subr.mxu0 0.0
    %969 = vmatpush1.msra.mxu0 0.0
    %970 = vmatprep.subr.mxu0 0.0
    %971 = vmatpush1.msra.mxu0 0.0
    %972 = vmatprep.mubr.f32.mxu0 0.0
    %973 = vmatmul.mubr.f32.gmra.mrb[0].mxu0 %v889
    %v974 = vpop.f32.mrb[0].mxu0
    %v975 = vadd.f32 0.0, %v974
    %v976 = vpop.f32.mrb[0].mxu0
    %977 = vmatprep.mubr.f32.mxu0 0.0
    %978 = vmatmul.mubr.f32.gmra.mrb[0].mxu0 %v890
    %v979 = vpop.f32.mrb[0].mxu0
    %v980 = vadd.f32 0.0, %v979
    %v981 = vpop.f32.mrb[0].mxu0
    %982 = vdwg.mxu0
    %v983 = vld [vmem:[%s4 + $0x4] sm:$0x1]
    %v984 = vlaneseq
    %v985 = vshrl.u32 %v984, 7
    %v986 = vsub.s32 0, %v985
    %v987 = vrot.slane %v983, %v986
    %988 = vmatprep.subr.mxu0 0.0
    %989 = vmatpush1.msra.mxu0 %v975
    %990 = vmatprep.subr.mxu0 0.0
    %991 = vmatpush1.msra.mxu0 %v980
    %992 = vmatprep.subr.mxu0 0.0
    %993 = vmatpush1.msra.mxu0 0.0
    %994 = vmatprep.subr.mxu0 0.0
    %995 = vmatpush1.msra.mxu0 0.0
    %996 = vmatprep.subr.mxu0 0.0
    %997 = vmatpush1.msra.mxu0 0.0
    %998 = vmatprep.subr.mxu0 0.0
    %999 = vmatpush1.msra.mxu0 0.0
    %1000 = vmatprep.subr.mxu0 0.0
    %1001 = vmatpush1.msra.mxu0 0.0
    %1002 = vmatprep.subr.mxu0 0.0
    %1003 = vmatpush1.msra.mxu0 0.0
    %1004 = vmatprep.subr.mxu0 0.0
    %1005 = vmatpush1.msra.mxu0 0.0
    %1006 = vmatprep.subr.mxu0 0.0
    %1007 = vmatpush1.msra.mxu0 0.0
    %1008 = vmatprep.subr.mxu0 0.0
    %1009 = vmatpush1.msra.mxu0 0.0
    %1010 = vmatprep.subr.mxu0 0.0
    %1011 = vmatpush1.msra.mxu0 0.0
    %1012 = vmatprep.subr.mxu0 0.0
    %1013 = vmatpush1.msra.mxu0 0.0
    %1014 = vmatprep.subr.mxu0 0.0
    %1015 = vmatpush1.msra.mxu0 0.0
    %1016 = vmatprep.subr.mxu0 0.0
    %1017 = vmatpush1.msra.mxu0 0.0
    %1018 = vmatprep.subr.mxu0 0.0
    %1019 = vmatpush1.msra.mxu0 0.0
    %1020 = vmatprep.subr.mxu0 0.0
    %1021 = vmatpush1.msra.mxu0 0.0
    %1022 = vmatprep.subr.mxu0 0.0
    %1023 = vmatpush1.msra.mxu0 0.0
    %1024 = vmatprep.subr.mxu0 0.0
    %1025 = vmatpush1.msra.mxu0 0.0
    %1026 = vmatprep.subr.mxu0 0.0
    %1027 = vmatpush1.msra.mxu0 0.0
    %1028 = vmatprep.subr.mxu0 0.0
    %1029 = vmatpush1.msra.mxu0 0.0
    %1030 = vmatprep.subr.mxu0 0.0
    %1031 = vmatpush1.msra.mxu0 0.0
    %1032 = vmatprep.subr.mxu0 0.0
    %1033 = vmatpush1.msra.mxu0 0.0
    %1034 = vmatprep.subr.mxu0 0.0
    %1035 = vmatpush1.msra.mxu0 0.0
    %1036 = vmatprep.subr.mxu0 0.0
    %1037 = vmatpush1.msra.mxu0 0.0
    %1038 = vmatprep.subr.mxu0 0.0
    %1039 = vmatpush1.msra.mxu0 0.0
    %1040 = vmatprep.subr.mxu0 0.0
    %1041 = vmatpush1.msra.mxu0 0.0
    %1042 = vmatprep.subr.mxu0 0.0
    %1043 = vmatpush1.msra.mxu0 0.0
    %1044 = vmatprep.subr.mxu0 0.0
    %1045 = vmatpush1.msra.mxu0 0.0
    %1046 = vmatprep.subr.mxu0 0.0
    %1047 = vmatpush1.msra.mxu0 0.0
    %1048 = vmatprep.subr.mxu0 0.0
    %1049 = vmatpush1.msra.mxu0 0.0
    %1050 = vmatprep.subr.mxu0 0.0
    %1051 = vmatpush1.msra.mxu0 0.0
    %1052 = vmatprep.mubr.f32.mxu0 0.0
    %1053 = vmatmul.mubr.f32.gmra.mrb[0].mxu0 %v288
    %v1054 = vpop.f32.mrb[0].mxu0
    %v1055 = vadd.f32 %v987, %v1054
    %v1056 = vpop.f32.mrb[0].mxu0
    %1057 = vmatprep.mubr.f32.mxu0 0.0
    %1058 = vmatmul.mubr.f32.gmra.mrb[0].mxu0 %v291
    %v1059 = vpop.f32.mrb[0].mxu0
    %v1060 = vadd.f32 %v987, %v1059
    %v1061 = vpop.f32.mrb[0].mxu0
    %1062 = vdwg.mxu0
    %v1063 = vmax.f32 %v1055, 0.0
    %v1064 = vmax.f32 %v1060, 0.0
    %s1065 = scalar_lea.vmem [#allocation7], 512
    %v1066 = vld [vmem:[%s1065] sm:$0xff]
    %v1067 = vld [vmem:[%s1065 + $0x8] sm:$0xff]
    %v1068 = vld [vmem:[%s1065 + $0x10] sm:$0xff]
    %v1069 = vld [vmem:[%s1065 + $0x18] sm:$0xff]
    %v1070 = vld [vmem:[%s1065 + $0x20] sm:$0xff]
    %v1071 = vld [vmem:[%s1065 + $0x28] sm:$0xff]
    %v1072 = vld [vmem:[%s1065 + $0x30] sm:$0xff]
    %v1073 = vld [vmem:[%s1065 + $0x38] sm:$0xff]
    %v1074 = vld [vmem:[%s1065 + $0x40] sm:$0xff]
    %v1075 = vld [vmem:[%s1065 + $0x48] sm:$0xff]
    %v1076 = vld [vmem:[%s1065 + $0x50] sm:$0xff]
    %v1077 = vld [vmem:[%s1065 + $0x58] sm:$0xff]
    %v1078 = vld [vmem:[%s1065 + $0x60] sm:$0xff]
    %v1079 = vld [vmem:[%s1065 + $0x68] sm:$0xff]
    %v1080 = vld [vmem:[%s1065 + $0x70] sm:$0xff]
    %v1081 = vld [vmem:[%s1065 + $0x78] sm:$0xff]
    %1082 = vmatprep.subr.mxu0 0.0
    %1083 = vmatpush1.msra.mxu0 %v1066
    %1084 = vmatprep.subr.mxu0 0.0
    %1085 = vmatpush1.msra.mxu0 %v1067
    %1086 = vmatprep.subr.mxu0 0.0
    %1087 = vmatpush1.msra.mxu0 %v1068
    %1088 = vmatprep.subr.mxu0 0.0
    %1089 = vmatpush1.msra.mxu0 %v1069
    %1090 = vmatprep.subr.mxu0 0.0
    %1091 = vmatpush1.msra.mxu0 %v1070
    %1092 = vmatprep.subr.mxu0 0.0
    %1093 = vmatpush1.msra.mxu0 %v1071
    %1094 = vmatprep.subr.mxu0 0.0
    %1095 = vmatpush1.msra.mxu0 %v1072
    %1096 = vmatprep.subr.mxu0 0.0
    %1097 = vmatpush1.msra.mxu0 %v1073
    %1098 = vmatprep.subr.mxu0 0.0
    %1099 = vmatpush1.msra.mxu0 %v1074
    %1100 = vmatprep.subr.mxu0 0.0
    %1101 = vmatpush1.msra.mxu0 %v1075
    %1102 = vmatprep.subr.mxu0 0.0
    %1103 = vmatpush1.msra.mxu0 %v1076
    %1104 = vmatprep.subr.mxu0 0.0
    %1105 = vmatpush1.msra.mxu0 %v1077
    %1106 = vmatprep.subr.mxu0 0.0
    %1107 = vmatpush1.msra.mxu0 %v1078
    %1108 = vmatprep.subr.mxu0 0.0
    %1109 = vmatpush1.msra.mxu0 %v1079
    %1110 = vmatprep.subr.mxu0 0.0
    %1111 = vmatpush1.msra.mxu0 %v1080
    %1112 = vmatprep.subr.mxu0 0.0
    %1113 = vmatpush1.msra.mxu0 %v1081
    %1114 = vmatprep.subr.mxu0 0.0
    %1115 = vmatpush1.msra.mxu0 0.0
    %1116 = vmatprep.subr.mxu0 0.0
    %1117 = vmatpush1.msra.mxu0 0.0
    %1118 = vmatprep.subr.mxu0 0.0
    %1119 = vmatpush1.msra.mxu0 0.0
    %1120 = vmatprep.subr.mxu0 0.0
    %1121 = vmatpush1.msra.mxu0 0.0
    %1122 = vmatprep.subr.mxu0 0.0
    %1123 = vmatpush1.msra.mxu0 0.0
    %1124 = vmatprep.subr.mxu0 0.0
    %1125 = vmatpush1.msra.mxu0 0.0
    %1126 = vmatprep.subr.mxu0 0.0
    %1127 = vmatpush1.msra.mxu0 0.0
    %1128 = vmatprep.subr.mxu0 0.0
    %1129 = vmatpush1.msra.mxu0 0.0
    %1130 = vmatprep.subr.mxu0 0.0
    %1131 = vmatpush1.msra.mxu0 0.0
    %1132 = vmatprep.subr.mxu0 0.0
    %1133 = vmatpush1.msra.mxu0 0.0
    %1134 = vmatprep.subr.mxu0 0.0
    %1135 = vmatpush1.msra.mxu0 0.0
    %1136 = vmatprep.subr.mxu0 0.0
    %1137 = vmatpush1.msra.mxu0 0.0
    %1138 = vmatprep.subr.mxu0 0.0
    %1139 = vmatpush1.msra.mxu0 0.0
    %1140 = vmatprep.subr.mxu0 0.0
    %1141 = vmatpush1.msra.mxu0 0.0
    %1142 = vmatprep.subr.mxu0 0.0
    %1143 = vmatpush1.msra.mxu0 0.0
    %1144 = vmatprep.subr.mxu0 0.0
    %1145 = vmatpush1.msra.mxu0 0.0
    %1146 = vmatprep.mubr.f32.mxu0 0.0
    %1147 = vmatmul.mubr.f32.gmra.mrb[0].mxu0 %v1063
    %v1148 = vpop.f32.mrb[0].mxu0
    %v1149 = vadd.f32 0.0, %v1148
    %v1150 = vpop.f32.mrb[0].mxu0
    %1151 = vmatprep.mubr.f32.mxu0 0.0
    %1152 = vmatmul.mubr.f32.gmra.mrb[0].mxu0 %v1064
    %v1153 = vpop.f32.mrb[0].mxu0
    %v1154 = vadd.f32 0.0, %v1153
    %v1155 = vpop.f32.mrb[0].mxu0
    %1156 = vdwg.mxu0
    %v1157 = vld [vmem:[%s4 + $0x5] sm:$0x1]
    %v1158 = vlaneseq
    %v1159 = vshrl.u32 %v1158, 7
    %v1160 = vsub.s32 0, %v1159
    %v1161 = vrot.slane %v1157, %v1160
    %1162 = vmatprep.subr.mxu0 0.0
    %1163 = vmatpush1.msra.mxu0 %v1149
    %1164 = vmatprep.subr.mxu0 0.0
    %1165 = vmatpush1.msra.mxu0 %v1154
    %1166 = vmatprep.subr.mxu0 0.0
    %1167 = vmatpush1.msra.mxu0 0.0
    %1168 = vmatprep.subr.mxu0 0.0
    %1169 = vmatpush1.msra.mxu0 0.0
    %1170 = vmatprep.subr.mxu0 0.0
    %1171 = vmatpush1.msra.mxu0 0.0
    %1172 = vmatprep.subr.mxu0 0.0
    %1173 = vmatpush1.msra.mxu0 0.0
    %1174 = vmatprep.subr.mxu0 0.0
    %1175 = vmatpush1.msra.mxu0 0.0
    %1176 = vmatprep.subr.mxu0 0.0
    %1177 = vmatpush1.msra.mxu0 0.0
    %1178 = vmatprep.subr.mxu0 0.0
    %1179 = vmatpush1.msra.mxu0 0.0
    %1180 = vmatprep.subr.mxu0 0.0
    %1181 = vmatpush1.msra.mxu0 0.0
    %1182 = vmatprep.subr.mxu0 0.0
    %1183 = vmatpush1.msra.mxu0 0.0
    %1184 = vmatprep.subr.mxu0 0.0
    %1185 = vmatpush1.msra.mxu0 0.0
    %1186 = vmatprep.subr.mxu0 0.0
    %1187 = vmatpush1.msra.mxu0 0.0
    %1188 = vmatprep.subr.mxu0 0.0
    %1189 = vmatpush1.msra.mxu0 0.0
    %1190 = vmatprep.subr.mxu0 0.0
    %1191 = vmatpush1.msra.mxu0 0.0
    %1192 = vmatprep.subr.mxu0 0.0
    %1193 = vmatpush1.msra.mxu0 0.0
    %1194 = vmatprep.subr.mxu0 0.0
    %1195 = vmatpush1.msra.mxu0 0.0
    %1196 = vmatprep.subr.mxu0 0.0
    %1197 = vmatpush1.msra.mxu0 0.0
    %1198 = vmatprep.subr.mxu0 0.0
    %1199 = vmatpush1.msra.mxu0 0.0
    %1200 = vmatprep.subr.mxu0 0.0
    %1201 = vmatpush1.msra.mxu0 0.0
    %1202 = vmatprep.subr.mxu0 0.0
    %1203 = vmatpush1.msra.mxu0 0.0
    %1204 = vmatprep.subr.mxu0 0.0
    %1205 = vmatpush1.msra.mxu0 0.0
    %1206 = vmatprep.subr.mxu0 0.0
    %1207 = vmatpush1.msra.mxu0 0.0
    %1208 = vmatprep.subr.mxu0 0.0
    %1209 = vmatpush1.msra.mxu0 0.0
    %1210 = vmatprep.subr.mxu0 0.0
    %1211 = vmatpush1.msra.mxu0 0.0
    %1212 = vmatprep.subr.mxu0 0.0
    %1213 = vmatpush1.msra.mxu0 0.0
    %1214 = vmatprep.subr.mxu0 0.0
    %1215 = vmatpush1.msra.mxu0 0.0
    %1216 = vmatprep.subr.mxu0 0.0
    %1217 = vmatpush1.msra.mxu0 0.0
    %1218 = vmatprep.subr.mxu0 0.0
    %1219 = vmatpush1.msra.mxu0 0.0
    %1220 = vmatprep.subr.mxu0 0.0
    %1221 = vmatpush1.msra.mxu0 0.0
    %1222 = vmatprep.subr.mxu0 0.0
    %1223 = vmatpush1.msra.mxu0 0.0
    %1224 = vmatprep.subr.mxu0 0.0
    %1225 = vmatpush1.msra.mxu0 0.0
    %1226 = vmatprep.mubr.f32.mxu0 0.0
    %1227 = vmatmul.mubr.f32.gmra.mrb[0].mxu0 %v288
    %v1228 = vpop.f32.mrb[0].mxu0
    %v1229 = vadd.f32 %v1161, %v1228
    %v1230 = vpop.f32.mrb[0].mxu0
    %1231 = vmatprep.mubr.f32.mxu0 0.0
    %1232 = vmatmul.mubr.f32.gmra.mrb[0].mxu0 %v291
    %v1233 = vpop.f32.mrb[0].mxu0
    %v1234 = vadd.f32 %v1161, %v1233
    %v1235 = vpop.f32.mrb[0].mxu0
    %1236 = vdwg.mxu0
    %1237 = vst [vmem:[%s5] sm:$0xff] %v1229
    %1238 = vst [vmem:[%s5 + $0x8] sm:$0xff] %v1234
    // Predicated region
    $region38: #{gcn_forward.1} parent=1 // pred_check
      _
    $region39: #{gcn_forward.1} parent=1 // pred_check_branch
      %1240 = sbr.rel (0) target = $region41
    $region40: #{gcn_forward.1} parent=1 // pred_region
      _
    $region41: #{gcn_forward.1} parent=1 // pred_fallthru
      _
    // Predicated region
    $region42: #{gcn_forward.1} parent=1 // pred_check
      _
    $region43: #{gcn_forward.1} parent=1 // pred_check_branch
      %1242 = sbr.rel (0) target = $region45
    $region44: #{gcn_forward.1} parent=1 // pred_region
      _
    $region45: #{gcn_forward.1} parent=1 // pred_fallthru
      _
    %1243 = vsyncpa [#allocation3], 1
    %1244 = vsyncpa [#allocation5], 1
    %1245 = vsyncpa [#allocation8], 1

</llo_original>
